<compile_context>
chip_gen: v6e
topology: v6e:2x2x1
jax: 0.10.0
libtpu: 0.0.40
codegen_flags: <defaults>
</compile_context>

<pallas_src>
import math
from functools import partial

import jax
import jax.numpy as jnp
from jax.experimental import pallas as pl
from jax.experimental.pallas import tpu as pltpu


# ------------------------- tiling helpers -------------------------

def _pick_rows_tile(m):
    """Largest row tile (<=512, multiple of 8) dividing m that still leaves >=2
    grid steps (so v7x's second TensorCore gets work); fall back to full m."""
    for cand in (512, 448, 384, 256, 192, 128, 96, 64, 32, 16, 8):
        if m % cand == 0 and m // cand >= 2:
            return cand
    return m


def _pick_k_tile(k):
    """K tile: lane-aligned (multiple of 128) divisor of K, or the whole K when
    it is already small enough to keep resident."""
    if k <= 512:
        return k
    for cand in (512, 384, 256, 128):
        if k % cand == 0:
            return cand
    return k


# ------------------------- fused kernel -------------------------

def _linear_ln_kernel(x_ref, w_ref, b_ref, g_ref, beta_ref, o_ref, acc_ref, *, eps):
    """o = LayerNorm(x @ w + b): bf16 MXU matmul, f32 accumulation in VMEM scratch,
    LayerNorm(+affine) epilogue on the fully-resident (tm, N) output tile."""
    k = pl.program_id(1)
    nk = pl.num_programs(1)

    @pl.when(k == 0)
    def _():
        acc_ref[...] = jnp.zeros_like(acc_ref)

    acc_ref[...] += jnp.dot(x_ref[...], w_ref[...],
                            preferred_element_type=jnp.float32)

    @pl.when(k == nk - 1)
    def _():
        y = acc_ref[...] + b_ref[...]
        mean = jnp.mean(y, axis=-1, keepdims=True)
        var = jnp.mean(jnp.square(y - mean), axis=-1, keepdims=True)
        yn = (y - mean) * jax.lax.rsqrt(var + eps)
        o_ref[...] = (yn * g_ref[...] + beta_ref[...]).astype(o_ref.dtype)


def pallas_linear_layernorm(x2d, w, b, gamma, beta, *, eps=1e-5,
                            out_dtype=jnp.float32):
    """(M, K) @ (K, N) + b, then LayerNorm over N — one fused pallas_call."""
    M, K = x2d.shape
    N = w.shape[1]
    tm = _pick_rows_tile(M)
    tk = _pick_k_tile(K)

    x_bf = x2d.astype(jnp.bfloat16)          # bf16 operands, f32 accumulation
    w_bf = w.astype(jnp.bfloat16)

    return pl.pallas_call(
        partial(_linear_ln_kernel, eps=eps),
        out_shape=jax.ShapeDtypeStruct((M, N), out_dtype),
        grid_spec=pltpu.PrefetchScalarGridSpec(
            num_scalar_prefetch=0,
            grid=(M // tm, K // tk),                       # reduction axis last
            in_specs=[
                pl.BlockSpec((tm, tk), lambda i, k: (i, k)),   # activations
                pl.BlockSpec((tk, N), lambda i, k: (k, 0)),    # weight stream
                pl.BlockSpec((1, N), lambda i, k: (0, 0)),     # linear bias
                pl.BlockSpec((1, N), lambda i, k: (0, 0)),     # LN gamma
                pl.BlockSpec((1, N), lambda i, k: (0, 0)),     # LN beta
            ],
            out_specs=pl.BlockSpec((tm, N), lambda i, k: (i, 0)),
            scratch_shapes=[pltpu.VMEM((tm, N), jnp.float32)],
        ),
        compiler_params=pltpu.CompilerParams(
            dimension_semantics=("parallel", "arbitrary")),
    )(x_bf, w_bf,
      b.reshape(1, N).astype(jnp.float32),
      gamma.reshape(1, N).astype(jnp.float32),
      beta.reshape(1, N).astype(jnp.float32))


# ------------------------- PatchMerging forward -------------------------

def patch_merging(x, w, b, gamma, beta):
    """x: (b, (2h)*(2w), C)  ->  (b, h*w, 2C), matching the PyTorch module."""
    bsz, seq, c = x.shape
    h = wd = math.isqrt(seq) // 2
    # rearrange 'b (h s1 w s2) c -> b (h w) (s2 s1 c)', s1=s2=2  (plain-JAX glue)
    y = x.reshape(bsz, h, 2, wd, 2, c)
    y = y.transpose(0, 1, 3, 4, 2, 5)                    # (b, h, w, s2, s1, c)
    y = y.reshape(bsz * h * wd, 4 * c)
    out = pallas_linear_layernorm(y, w, b, gamma, beta)  # fused linear + LN
    return out.reshape(bsz, h * wd, 2 * c)


# ------------------------- reference (for numerics check) -------------------------

def patch_merging_reference(x, w, b, gamma, beta, eps=1e-5):
    bsz, seq, c = x.shape
    h = wd = math.isqrt(seq) // 2
    y = x.reshape(bsz, h, 2, wd, 2, c).transpose(0, 1, 3, 4, 2, 5)
    y = y.reshape(bsz, h * wd, 4 * c)
    # mimic kernel numerics: bf16 operands, f32 accumulation
    y = jnp.dot(y.astype(jnp.bfloat16).astype(jnp.float32),
                w.astype(jnp.bfloat16).astype(jnp.float32)) + b
    mean = jnp.mean(y, axis=-1, keepdims=True)
    var = jnp.mean(jnp.square(y - mean), axis=-1, keepdims=True)
    return (y - mean) * jax.lax.rsqrt(var + eps) * gamma + beta


# ------------------------- demo -------------------------

if __name__ == "__main__":
    key = jax.random.PRNGKey(0)
    k_x, k_w, k_b, k_g, k_beta = jax.random.split(key, 5)

    B, C = 2, 64
    H = W = 16                       # seq = 256 -> output seq = 64
    seq = H * W

    x = jax.random.normal(k_x, (B, seq, C), dtype=jnp.float32)
    bound = 1.0 / math.sqrt(4 * C)   # nn.Linear default init range
    w = jax.random.uniform(k_w, (4 * C, 2 * C), jnp.float32, -bound, bound)
    b = jax.random.uniform(k_b, (2 * C,), jnp.float32, -bound, bound)
    gamma = 1.0 + 0.1 * jax.random.normal(k_g, (2 * C,), dtype=jnp.float32)
    beta = 0.1 * jax.random.normal(k_beta, (2 * C,), dtype=jnp.float32)

    fwd = jax.jit(patch_merging)
    out = jax.block_until_ready(fwd(x, w, b, gamma, beta))

    assert out.shape == (B, seq // 4, 2 * C), out.shape
    assert bool(jnp.all(jnp.isfinite(out)))

    ref = patch_merging_reference(x, w, b, gamma, beta)
    assert bool(jnp.allclose(out, ref, atol=2e-3, rtol=2e-3)), float(
        jnp.max(jnp.abs(out - ref)))

    print("KERNEL_OK")
</pallas_src>

<mosaic_0001>
module attributes {stable_mosaic.version = 11 : i64} {
  func.func @_linear_ln_kernel(%arg0: i32, %arg1: i32, %arg2: memref<64x256xbf16, #tpu.memory_space<vmem>>, %arg3: memref<256x128xbf16, #tpu.memory_space<vmem>>, %arg4: memref<1x128xf32, #tpu.memory_space<vmem>>, %arg5: memref<1x128xf32, #tpu.memory_space<vmem>>, %arg6: memref<1x128xf32, #tpu.memory_space<vmem>>, %arg7: memref<64x128xf32, #tpu.memory_space<vmem>>, %arg8: memref<64x128xf32, #tpu.memory_space<vmem>>) attributes {dimension_semantics = [#tpu.dimension_semantics<parallel>, #tpu.dimension_semantics<arbitrary>], iteration_bounds = array<i64: 2, 1>, scalar_prefetch = 0 : i64, scratch_operands = 1 : i64, tpu.core_type = #tpu.core_type<tc>, window_params = [{transform_indices = @transform_0, window_bounds = array<i64: 64, 256>}, {transform_indices = @transform_1, window_bounds = array<i64: 256, 128>}, {pipeline_mode = #tpu.pipeline_mode<synchronous>, transform_indices = @transform_2, window_bounds = array<i64: 1, 128>}, {pipeline_mode = #tpu.pipeline_mode<synchronous>, transform_indices = @transform_3, window_bounds = array<i64: 1, 128>}, {pipeline_mode = #tpu.pipeline_mode<synchronous>, transform_indices = @transform_4, window_bounds = array<i64: 1, 128>}, {transform_indices = @transform_5, window_bounds = array<i64: 64, 128>}]} {
    %c0_i32 = arith.constant 0 : i32
    %0 = arith.cmpi eq, %arg1, %c0_i32 : i32
    %1 = arith.extui %0 : i1 to i32
    %c0_i32_0 = arith.constant 0 : i32
    %2 = arith.cmpi ne, %1, %c0_i32_0 : i32
    scf.if %2 {
      %cst_10 = arith.constant 0.000000e+00 : f32
      %12 = vector.broadcast %cst_10 : f32 to vector<64x128xf32>
      %c0_11 = arith.constant 0 : index
      %c0_12 = arith.constant 0 : index
      %13 = vector.load %arg8[%c0_11, %c0_12] : memref<64x128xf32, #tpu.memory_space<vmem>>, vector<64x128xf32>
      tpu.vector_store %arg8[%c0_11, %c0_12], %12 {strides = array<i32>} : memref<64x128xf32, #tpu.memory_space<vmem>>, vector<64x128xf32>,
    } else {
    }
    %c0 = arith.constant 0 : index
    %c0_1 = arith.constant 0 : index
    %3 = vector.load %arg8[%c0, %c0_1] : memref<64x128xf32, #tpu.memory_space<vmem>>, vector<64x128xf32>
    %c0_2 = arith.constant 0 : index
    %c0_3 = arith.constant 0 : index
    %4 = vector.load %arg2[%c0_2, %c0_3] : memref<64x256xbf16, #tpu.memory_space<vmem>>, vector<64x256xbf16>
    %c0_4 = arith.constant 0 : index
    %c0_5 = arith.constant 0 : index
    %5 = vector.load %arg3[%c0_4, %c0_5] : memref<256x128xbf16, #tpu.memory_space<vmem>>, vector<256x128xbf16>
    %cst = arith.constant dense<0.000000e+00> : vector<64x128xf32>
    %6 = tpu.matmul %4, %5, %cst {dimension_numbers = #tpu.dot_dimension_numbers<[1], [0], [0], [1], [0, 0, 1, 1], [], []>} : vector<64x256xbf16>, vector<256x128xbf16>, vector<64x128xf32> -> vector<64x128xf32>
    %7 = arith.addf %3, %6 : vector<64x128xf32>
    %c0_6 = arith.constant 0 : index
    %c0_7 = arith.constant 0 : index
    %8 = vector.load %arg8[%c0_6, %c0_7] : memref<64x128xf32, #tpu.memory_space<vmem>>, vector<64x128xf32>
    tpu.vector_store %arg8[%c0_6, %c0_7], %7 {strides = array<i32>} : memref<64x128xf32, #tpu.memory_space<vmem>>, vector<64x128xf32>,
    %c0_i32_8 = arith.constant 0 : i32
    %9 = arith.cmpi eq, %arg1, %c0_i32_8 : i32
    %10 = arith.extui %9 : i1 to i32
    %c0_i32_9 = arith.constant 0 : i32
    %11 = arith.cmpi ne, %10, %c0_i32_9 : i32
    scf.if %11 {
      %c0_10 = arith.constant 0 : index
      %c0_11 = arith.constant 0 : index
      %12 = vector.load %arg8[%c0_10, %c0_11] : memref<64x128xf32, #tpu.memory_space<vmem>>, vector<64x128xf32>
      %c0_12 = arith.constant 0 : index
      %c0_13 = arith.constant 0 : index
      %13 = vector.load %arg4[%c0_12, %c0_13] : memref<1x128xf32, #tpu.memory_space<vmem>>, vector<1x128xf32>
      %14 = vector.broadcast %13 : vector<1x128xf32> to vector<64x128xf32>
      %15 = arith.addf %12, %14 : vector<64x128xf32>
      %cst_14 = arith.constant dense<0.000000e+00> : vector<64xf32>
      %16 = vector.multi_reduction <add>, %15, %cst_14 [1] : vector<64x128xf32> to vector<64xf32>
      %17 = vector.shape_cast %16 : vector<64xf32> to vector<64x1xf32>
      %cst_15 = arith.constant 1.280000e+02 : f32
      %18 = vector.broadcast %cst_15 : f32 to vector<64x1xf32>
      %19 = arith.divf %17, %18 : vector<64x1xf32>
      %20 = vector.broadcast %19 : vector<64x1xf32> to vector<64x128xf32>
      %21 = arith.subf %15, %20 : vector<64x128xf32>
      %22 = arith.mulf %21, %21 : vector<64x128xf32>
      %cst_16 = arith.constant dense<0.000000e+00> : vector<64xf32>
      %23 = vector.multi_reduction <add>, %22, %cst_16 [1] : vector<64x128xf32> to vector<64xf32>
      %24 = vector.shape_cast %23 : vector<64xf32> to vector<64x1xf32>
      %cst_17 = arith.constant 1.280000e+02 : f32
      %25 = vector.broadcast %cst_17 : f32 to vector<64x1xf32>
      %26 = arith.divf %24, %25 : vector<64x1xf32>
      %27 = vector.broadcast %19 : vector<64x1xf32> to vector<64x128xf32>
      %28 = arith.subf %15, %27 : vector<64x128xf32>
      %cst_18 = arith.constant 9.99999974E-6 : f32
      %29 = vector.broadcast %cst_18 : f32 to vector<64x1xf32>
      %30 = arith.addf %26, %29 : vector<64x1xf32>
      %31 = math.rsqrt %30 : vector<64x1xf32>
      %32 = vector.broadcast %31 : vector<64x1xf32> to vector<64x128xf32>
      %33 = arith.mulf %28, %32 : vector<64x128xf32>
      %c0_19 = arith.constant 0 : index
      %c0_20 = arith.constant 0 : index
      %34 = vector.load %arg5[%c0_19, %c0_20] : memref<1x128xf32, #tpu.memory_space<vmem>>, vector<1x128xf32>
      %35 = vector.broadcast %34 : vector<1x128xf32> to vector<64x128xf32>
      %36 = arith.mulf %33, %35 : vector<64x128xf32>
      %c0_21 = arith.constant 0 : index
      %c0_22 = arith.constant 0 : index
      %37 = vector.load %arg6[%c0_21, %c0_22] : memref<1x128xf32, #tpu.memory_space<vmem>>, vector<1x128xf32>
      %38 = vector.broadcast %37 : vector<1x128xf32> to vector<64x128xf32>
      %39 = arith.addf %36, %38 : vector<64x128xf32>
      %c0_23 = arith.constant 0 : index
      %c0_24 = arith.constant 0 : index
      %40 = vector.load %arg7[%c0_23, %c0_24] : memref<64x128xf32, #tpu.memory_space<vmem>>, vector<64x128xf32>
      tpu.vector_store %arg7[%c0_23, %c0_24], %39 {strides = array<i32>} : memref<64x128xf32, #tpu.memory_space<vmem>>, vector<64x128xf32>,
    } else {
    }
    return
  }
  func.func @transform_0(%arg0: i32, %arg1: i32) -> (i32, i32) {
    %c0_i32 = arith.constant 0 : i32
    return %arg0, %arg1 : i32, i32
  }
  func.func @transform_1(%arg0: i32, %arg1: i32) -> (i32, i32) {
    %c0_i32 = arith.constant 0 : i32
    %c0_i32_0 = arith.constant 0 : i32
    return %arg1, %c0_i32 : i32, i32
  }
  func.func @transform_2(%arg0: i32, %arg1: i32) -> (i32, i32) {
    %c0_i32 = arith.constant 0 : i32
    %c0_i32_0 = arith.constant 0 : i32
    %c0_i32_1 = arith.constant 0 : i32
    return %c0_i32, %c0_i32_0 : i32, i32
  }
  func.func @transform_3(%arg0: i32, %arg1: i32) -> (i32, i32) {
    %c0_i32 = arith.constant 0 : i32
    %c0_i32_0 = arith.constant 0 : i32
    %c0_i32_1 = arith.constant 0 : i32
    return %c0_i32, %c0_i32_0 : i32, i32
  }
  func.func @transform_4(%arg0: i32, %arg1: i32) -> (i32, i32) {
    %c0_i32 = arith.constant 0 : i32
    %c0_i32_0 = arith.constant 0 : i32
    %c0_i32_1 = arith.constant 0 : i32
    return %c0_i32, %c0_i32_0 : i32, i32
  }
  func.func @transform_5(%arg0: i32, %arg1: i32) -> (i32, i32) {
    %c0_i32 = arith.constant 0 : i32
    %c0_i32_0 = arith.constant 0 : i32
    return %arg0, %c0_i32 : i32, i32
  }
}

</mosaic_0001>

<llo_original>
// kernel: patch_merging.1
$region0: #{patch_merging.1}
  #allocation0 [shape = 'u32[]', space=smem, size = 0x4, offset = 0x4, fixed_abs, tag = 'smem constant byte address 0x4 - core index']
  #allocation1 [shape = 'u32[144,128]{1,0:T(1,128)}', space=vmem, size = 0x12000, scoped, tag = 'internal scratch']
  #allocation2 [shape = 'f32[64,128]{1,0:T(8,128)}', space=vmem, size = 0x8000, scoped, tag = 'scratch operand']
  %s0 = inlined_call_operand.vmem [shape: bf16[128,256], index: 0, kind: input, shape index: {}]
  %s1 = inlined_call_operand.vmem [shape: bf16[256,128], index: 1, kind: input, shape index: {}]
  %s2 = inlined_call_operand.vmem [shape: f32[1,128], index: 2, kind: input, shape index: {}]
  %s3 = inlined_call_operand.vmem [shape: f32[1,128], index: 3, kind: input, shape index: {}]
  %s4 = inlined_call_operand.vmem [shape: f32[1,128], index: 4, kind: input, shape index: {}]
  %s5 = inlined_call_operand.hbm [shape: f32[128,128], index: 5, kind: output, shape index: {}]
  %s6 = sld [smem:[#allocation0]]
  $region61: #{patch_merging.1} parent=0
    _
  %s8 = ssub.s32 1, %s6
  %s9 = scalar_select 0, %s8, %s6
  $region1: #{patch_merging.1} parent=0
    #allocation3 [shape = 'u8[65536]{0}', space=vmem, size = 0x10000, scoped, tag = 'output window, operand 0']
    #allocation4 [shape = 's32[2]{0}', space=sflag, size = 0x8, scoped, tag = 'scoped memory for patch_merging.1']
    %10 = vsyncpa [#allocation4], 0
    %s11 = scalar_lea.sflag [#allocation4], 1
    %12 = vsyncpa %s11, 0
    loop: start=0, step=1, limit=4
    $region2: #{patch_merging.1} parent=1 // loop_pre_header
      _
    $region3: #{patch_merging.1} parent=1 // loop_header
      %s14 = sphi 0, %s18
      %p15 = scmp.ge.s32.totalorder %s14, 4
      %s21 = sphi 0, %s33
      %s22 = sphi 0, %s29
      %s23 = sphi 0, %s21
      %s24 = sphi 0, %s22
      %s25 = sphi 0, %s23
      %s26 = sphi 0, %s24
      %s38 = sphi 0, %s40
      %s41 = sphi 0, %s38
      %s42 = sphi 0, %s41
      %s58 = sphi 0, %s42
      %s64 = sphi 0, %s66
      %s67 = sphi 0, %s64
      %s68 = sphi 0, %s67
      %s84 = sphi 0, %s68
      %s88 = sphi 0, %s88
      %s90 = sphi 0, %s88
      %s91 = sphi 0, %s90
      %s105 = sphi 0, %s91
      %s109 = sphi 0, %s109
      %s111 = sphi 0, %s109
      %s112 = sphi 0, %s111
      %s126 = sphi 0, %s112
      %s130 = sphi 0, %s130
      %s132 = sphi 0, %s130
      %s133 = sphi 0, %s132
      %s147 = sphi 0, %s133
      %s153 = sphi 0, %s155
      %s156 = sphi 0, %s153
      %s157 = sphi 0, %s156
      %s173 = sphi 0, %s157
    $region4: #{patch_merging.1} parent=1 // loop_header_branch
      %17 = sbr.rel (%p15) target = $region8
    $region5: #{patch_merging.1} parent=1 // loop_body
      %s19 = ssub.s32 %s14, 1
      %s20 = ssub.s32 %s14, 2
      %s27 = sadd.s32 1, %s22
      %p28 = scmp.ge.s32.totalorder %s27, 1
      %s29 = scalar_select %p28, 0, %s27
      %s30 = sadd.s32 1, %s21
      %s31 = scalar_select %p28, %s30, %s21
      %p32 = scmp.ge.s32.totalorder %s31, 2
      %s33 = scalar_select %p32, 0, %s31
      %s34 = ssub.s32 %s21, %s33
      %s35 = ssub.s32 %s22, %s29
      %s36 = sor.u32 %s34, %s35
      %p37 = scmp.eq.s32.totalorder %s36, 0
      %s39 = sadd.s32 %s38, 1
      %s40 = scalar_select %p37, %s38, %s39
      %p43 = pneg %p37
      %p44 = scmp.eq.s32.totalorder %s14, 1
      %p45 = por %p43, %p44
      %p46 = scmp.ne.s32.totalorder %s38, %s41
      %p47 = scmp.eq.s32.totalorder %s14, 0
      %p48 = por %p46, %p47
      %p49 = scmp.ne.s32.totalorder %s38, %s41
      %p50 = scmp.eq.s32.totalorder %s19, 1
      %p51 = por %p49, %p50
      %p52 = scmp.ne.s32.totalorder %s41, %s42
      %p53 = scmp.eq.s32.totalorder %s19, 0
      %p54 = por %p52, %p53
      %p55 = scmp.ne.s32.totalorder %s41, %s42
      %p56 = scmp.eq.s32.totalorder %s20, 1
      %p57 = por %p55, %p56
      %p59 = scmp.ne.s32.totalorder %s42, %s58
      %p60 = scmp.eq.s32.totalorder %s20, 0
      %p61 = por %p59, %p60
      %s62 = ssub.s32 %s22, %s29
      %p63 = scmp.eq.s32.totalorder %s62, 0
      %s65 = sadd.s32 %s64, 1
      %s66 = scalar_select %p63, %s64, %s65
      %p69 = pneg %p63
      %p70 = scmp.eq.s32.totalorder %s14, 1
      %p71 = por %p69, %p70
      %p72 = scmp.ne.s32.totalorder %s64, %s67
      %p73 = scmp.eq.s32.totalorder %s14, 0
      %p74 = por %p72, %p73
      %p75 = scmp.ne.s32.totalorder %s64, %s67
      %p76 = scmp.eq.s32.totalorder %s19, 1
      %p77 = por %p75, %p76
      %p78 = scmp.ne.s32.totalorder %s67, %s68
      %p79 = scmp.eq.s32.totalorder %s19, 0
      %p80 = por %p78, %p79
      %p81 = scmp.ne.s32.totalorder %s67, %s68
      %p82 = scmp.eq.s32.totalorder %s20, 1
      %p83 = por %p81, %p82
      %p85 = scmp.ne.s32.totalorder %s68, %s84
      %p86 = scmp.eq.s32.totalorder %s20, 0
      %p87 = por %p85, %p86
      %s89 = sadd.s32 %s88, 1
      %p92 = scmp.eq.s32.totalorder %s14, 1
      %p93 = scmp.ne.s32.totalorder %s88, %s90
      %p94 = scmp.eq.s32.totalorder %s14, 0
      %p95 = por %p93, %p94
      %p96 = scmp.ne.s32.totalorder %s88, %s90
      %p97 = scmp.eq.s32.totalorder %s19, 1
      %p98 = por %p96, %p97
      %p99 = scmp.ne.s32.totalorder %s90, %s91
      %p100 = scmp.eq.s32.totalorder %s19, 0
      %p101 = por %p99, %p100
      %p102 = scmp.ne.s32.totalorder %s90, %s91
      %p103 = scmp.eq.s32.totalorder %s20, 1
      %p104 = por %p102, %p103
      %p106 = scmp.ne.s32.totalorder %s91, %s105
      %p107 = scmp.eq.s32.totalorder %s20, 0
      %p108 = por %p106, %p107
      %s110 = sadd.s32 %s109, 1
      %p113 = scmp.eq.s32.totalorder %s14, 1
      %p114 = scmp.ne.s32.totalorder %s109, %s111
      %p115 = scmp.eq.s32.totalorder %s14, 0
      %p116 = por %p114, %p115
      %p117 = scmp.ne.s32.totalorder %s109, %s111
      %p118 = scmp.eq.s32.totalorder %s19, 1
      %p119 = por %p117, %p118
      %p120 = scmp.ne.s32.totalorder %s111, %s112
      %p121 = scmp.eq.s32.totalorder %s19, 0
      %p122 = por %p120, %p121
      %p123 = scmp.ne.s32.totalorder %s111, %s112
      %p124 = scmp.eq.s32.totalorder %s20, 1
      %p125 = por %p123, %p124
      %p127 = scmp.ne.s32.totalorder %s112, %s126
      %p128 = scmp.eq.s32.totalorder %s20, 0
      %p129 = por %p127, %p128
      %s131 = sadd.s32 %s130, 1
      %p134 = scmp.eq.s32.totalorder %s14, 1
      %p135 = scmp.ne.s32.totalorder %s130, %s132
      %p136 = scmp.eq.s32.totalorder %s14, 0
      %p137 = por %p135, %p136
      %p138 = scmp.ne.s32.totalorder %s130, %s132
      %p139 = scmp.eq.s32.totalorder %s19, 1
      %p140 = por %p138, %p139
      %p141 = scmp.ne.s32.totalorder %s132, %s133
      %p142 = scmp.eq.s32.totalorder %s19, 0
      %p143 = por %p141, %p142
      %p144 = scmp.ne.s32.totalorder %s132, %s133
      %p145 = scmp.eq.s32.totalorder %s20, 1
      %p146 = por %p144, %p145
      %p148 = scmp.ne.s32.totalorder %s133, %s147
      %p149 = scmp.eq.s32.totalorder %s20, 0
      %p150 = por %p148, %p149
      %s151 = ssub.s32 %s21, %s33
      %p152 = scmp.eq.s32.totalorder %s151, 0
      %s154 = sadd.s32 %s153, 1
      %s155 = scalar_select %p152, %s153, %s154
      %p158 = pneg %p152
      %p159 = scmp.eq.s32.totalorder %s14, 1
      %p160 = por %p158, %p159
      %p161 = scmp.ne.s32.totalorder %s153, %s156
      %p162 = scmp.eq.s32.totalorder %s14, 0
      %p163 = por %p161, %p162
      %p164 = scmp.ne.s32.totalorder %s153, %s156
      %p165 = scmp.eq.s32.totalorder %s19, 1
      %p166 = por %p164, %p165
      %p167 = scmp.ne.s32.totalorder %s156, %s157
      %p168 = scmp.eq.s32.totalorder %s19, 0
      %p169 = por %p167, %p168
      %p170 = scmp.ne.s32.totalorder %s156, %s157
      %p171 = scmp.eq.s32.totalorder %s20, 1
      %p172 = por %p170, %p171
      %p174 = scmp.ne.s32.totalorder %s157, %s173
      %p175 = scmp.eq.s32.totalorder %s20, 0
      %p176 = por %p174, %p175
      %p177 = scmp.le.s32.totalorder 1, %s14
      %p178 = scmp.lt.s32.totalorder %s14, 3
      %p179 = pnand %p177, %p178
      %p180 = pneg %p179
      // Predicated region
      $region9: #{patch_merging.1} parent=5 // pred_check
        _
      $region10: #{patch_merging.1} parent=5 // pred_check_branch
        %182 = sbr.rel (%p179) target = $region12
      $region11: #{patch_merging.1} parent=5 // pred_region
        %s183 = ssub.s32 %s14, 1
        // Predicated region
        $region13: #{patch_merging.1} parent=11 // pred_check
          %p184 = pneg %p80
        $region14: #{patch_merging.1} parent=11 // pred_check_branch
          %186 = sbr.rel (%p184) target = $region16
        $region15: #{patch_merging.1} parent=11 // pred_region
          %s187 = smul.u32 32, %s24
          %p188 = scmp.lt.s32.totalorder %s187, 31
          %s189 = scalar_select %p188, %s187, 31
          %s190 = smul.addr %s189, 4
          %s191 = scalar_lea.vmem %s1, %s190
          %s192 = smul.u32 32, %s24
        $region16: #{patch_merging.1} parent=11 // pred_fallthru
          _
        // Predicated region
        $region17: #{patch_merging.1} parent=11 // pred_check
          %p193 = pneg %p101
        $region18: #{patch_merging.1} parent=11 // pred_check_branch
          %195 = sbr.rel (%p193) target = $region20
        $region19: #{patch_merging.1} parent=11 // pred_region
          _
        $region20: #{patch_merging.1} parent=11 // pred_fallthru
          _
        // Predicated region
        $region21: #{patch_merging.1} parent=11 // pred_check
          %p196 = pneg %p122
        $region22: #{patch_merging.1} parent=11 // pred_check_branch
          %198 = sbr.rel (%p196) target = $region24
        $region23: #{patch_merging.1} parent=11 // pred_region
          _
        $region24: #{patch_merging.1} parent=11 // pred_fallthru
          _
        // Predicated region
        $region25: #{patch_merging.1} parent=11 // pred_check
          %p199 = pneg %p143
        $region26: #{patch_merging.1} parent=11 // pred_check_branch
          %201 = sbr.rel (%p199) target = $region28
        $region27: #{patch_merging.1} parent=11 // pred_region
          _
        $region28: #{patch_merging.1} parent=11 // pred_fallthru
          _
      $region12: #{patch_merging.1} parent=5 // pred_fallthru
        _
      %p202 = scmp.lt.s32.totalorder %s14, 2
      // Predicated region
      $region29: #{patch_merging.1} parent=5 // pred_check
        %p203 = pneg %p202
      $region30: #{patch_merging.1} parent=5 // pred_check_branch
        %205 = sbr.rel (%p203) target = $region32
      $region31: #{patch_merging.1} parent=5 // pred_region
        // Predicated region
        $region33: #{patch_merging.1} parent=31 // pred_check
          %p206 = pneg %p48
        $region34: #{patch_merging.1} parent=31 // pred_check_branch
          %208 = sbr.rel (%p206) target = $region36
        $region35: #{patch_merging.1} parent=31 // pred_region
          %s209 = smul.u32 8, %s21
          %s210 = smul.u32 2, %s22
          %p211 = scmp.lt.s32.totalorder %s209, 15
          %s212 = scalar_select %p211, %s209, 15
          %p213 = scmp.lt.s32.totalorder %s210, 1
          %s214 = scalar_select %p213, %s210, 1
          %s215 = smul.addr %s212, 2
          %s216 = sadd.s32 %s214, %s215
          %s217 = smul.addr %s216, 4
          %s218 = scalar_lea.vmem %s0, %s217
          %s219 = smul.u32 8, %s21
          %s220 = smul.u32 2, %s22
        $region36: #{patch_merging.1} parent=31 // pred_fallthru
          _
      $region32: #{patch_merging.1} parent=5 // pred_fallthru
        _
      %p221 = scmp.le.s32.totalorder 1, %s14
      %p222 = scmp.lt.s32.totalorder %s14, 3
      %p223 = pnand %p221, %p222
      %p224 = pneg %p223
      // Predicated region
      $region37: #{patch_merging.1} parent=5 // pred_check
        _
      $region38: #{patch_merging.1} parent=5 // pred_check_branch
        %226 = sbr.rel (%p223) target = $region40
      $region39: #{patch_merging.1} parent=5 // pred_region
        %s227 = ssub.s32 %s14, 1
        %s228 = smul.u32 8, %s23
        %s229 = smul.u32 2, %s24
        %p230 = scmp.lt.s32.totalorder %s228, 15
        %s231 = scalar_select %p230, %s228, 15
        %p232 = scmp.lt.s32.totalorder %s229, 1
        %s233 = scalar_select %p232, %s229, 1
        %s234 = smul.addr %s231, 2
        %s235 = sadd.s32 %s233, %s234
        %s236 = smul.addr %s235, 4
        %s237 = scalar_lea.vmem %s0, %s236
        %p238 = pneg %p54
        %p239 = pneg %p51
        %s240 = smul.u32 32, %s24
        %p241 = scmp.lt.s32.totalorder %s240, 31
        %s242 = scalar_select %p241, %s240, 31
        %s243 = smul.addr %s242, 4
        %s244 = scalar_lea.vmem %s1, %s243
        %p245 = pneg %p80
        %p246 = pneg %p77
        %p247 = pneg %p101
        %p248 = pneg %p98
        %p249 = pneg %p122
        %p250 = pneg %p119
        %p251 = pneg %p143
        %p252 = pneg %p140
        %p253 = pneg %p169
        %p254 = pneg %p166
        %s255 = sand.u32 %s156, 1
        %s256 = scalar_lea.sflag [#allocation4], %s255
        %s257 = sand.u32 %s156, 1
        %s258 = smul.addr %s257, 64
        %s259 = scalar_lea.vmem [#allocation3], %s258
        %s260 = smul.u32 8, %s23
        %s261 = smul.u32 2, %s24
        %p262 = scmp.lt.s32.totalorder %s260, 15
        %s263 = scalar_select %p262, %s260, 15
        %p264 = scmp.lt.s32.totalorder %s261, 1
        %s265 = scalar_select %p264, %s261, 1
        %s266 = smul.addr %s263, 2
        %s267 = sadd.s32 %s265, %s266
        %s268 = smul.addr %s267, 4
        %s269 = scalar_lea.vmem %s0, %s268
        %s270 = smul.u32 8, %s23
        %s271 = smul.u32 2, %s24
        %s272 = smul.u32 32, %s24
        %p273 = scmp.lt.s32.totalorder %s272, 31
        %s274 = scalar_select %p273, %s272, 31
        %s275 = smul.addr %s274, 4
        %s276 = scalar_lea.vmem %s1, %s275
        %s277 = smul.u32 32, %s24
        %s278 = smul.u32 8, %s23
        %p280 = scmp.eq.s32.totalorder %s24, 0
        // Predicated region
        $region41: #{patch_merging.1} parent=39 // pred_check
          %p281 = pneg %p280
        $region42: #{patch_merging.1} parent=39 // pred_check_branch
          %283 = sbr.rel (%p281) target = $region44
        $region43: #{patch_merging.1} parent=39 // pred_region
          %284 = vst [vmem:[#allocation2] sm:$0xff] 0.0
          %285 = vst [vmem:[#allocation2 + $0x8] sm:$0xff] 0.0
          %286 = vst [vmem:[#allocation2 + $0x10] sm:$0xff] 0.0
          %287 = vst [vmem:[#allocation2 + $0x18] sm:$0xff] 0.0
          %288 = vst [vmem:[#allocation2 + $0x20] sm:$0xff] 0.0
          %289 = vst [vmem:[#allocation2 + $0x28] sm:$0xff] 0.0
          %290 = vst [vmem:[#allocation2 + $0x30] sm:$0xff] 0.0
          %291 = vst [vmem:[#allocation2 + $0x38] sm:$0xff] 0.0
        $region44: #{patch_merging.1} parent=39 // pred_fallthru
          _
        %v292 = vld [vmem:[#allocation2] sm:$0xff]
        %v293 = vld [vmem:[#allocation2 + $0x8] sm:$0xff]
        %v294 = vld [vmem:[#allocation2 + $0x10] sm:$0xff]
        %v295 = vld [vmem:[#allocation2 + $0x18] sm:$0xff]
        %v296 = vld [vmem:[#allocation2 + $0x20] sm:$0xff]
        %v297 = vld [vmem:[#allocation2 + $0x28] sm:$0xff]
        %v298 = vld [vmem:[#allocation2 + $0x30] sm:$0xff]
        %v299 = vld [vmem:[#allocation2 + $0x38] sm:$0xff]
        %v300 = vld [vmem:[%s269] sm:$0xff]
        %v301 = vld [vmem:[%s269 + $0x8] sm:$0xff]
        %v302 = vld [vmem:[%s269 + $0x10] sm:$0xff]
        %v303 = vld [vmem:[%s269 + $0x18] sm:$0xff]
        %v304 = vld [vmem:[%s269 + $0x20] sm:$0xff]
        %v305 = vld [vmem:[%s269 + $0x28] sm:$0xff]
        %v306 = vld [vmem:[%s269 + $0x30] sm:$0xff]
        %v307 = vld [vmem:[%s269 + $0x38] sm:$0xff]
        %v308 = vld [vmem:[%s276] sm:$0xf]
        %v309 = vld [vmem:[%s276 + $0x4] sm:$0xf]
        %v310 = vld [vmem:[%s276 + $0x8] sm:$0xf]
        %v311 = vld [vmem:[%s276 + $0xc] sm:$0xf]
        %v312 = vld [vmem:[%s276 + $0x10] sm:$0xf]
        %v313 = vld [vmem:[%s276 + $0x14] sm:$0xf]
        %v314 = vld [vmem:[%s276 + $0x18] sm:$0xf]
        %v315 = vld [vmem:[%s276 + $0x1c] sm:$0xf]
        %v316 = vld [vmem:[%s276 + $0x20] sm:$0xf]
        %v317 = vld [vmem:[%s276 + $0x24] sm:$0xf]
        %v318 = vld [vmem:[%s276 + $0x28] sm:$0xf]
        %v319 = vld [vmem:[%s276 + $0x2c] sm:$0xf]
        %v320 = vld [vmem:[%s276 + $0x30] sm:$0xf]
        %v321 = vld [vmem:[%s276 + $0x34] sm:$0xf]
        %v322 = vld [vmem:[%s276 + $0x38] sm:$0xf]
        %v323 = vld [vmem:[%s276 + $0x3c] sm:$0xf]
        %v324 = vld [vmem:[%s276 + $0x40] sm:$0xf]
        %v325 = vld [vmem:[%s276 + $0x44] sm:$0xf]
        %v326 = vld [vmem:[%s276 + $0x48] sm:$0xf]
        %v327 = vld [vmem:[%s276 + $0x4c] sm:$0xf]
        %v328 = vld [vmem:[%s276 + $0x50] sm:$0xf]
        %v329 = vld [vmem:[%s276 + $0x54] sm:$0xf]
        %v330 = vld [vmem:[%s276 + $0x58] sm:$0xf]
        %v331 = vld [vmem:[%s276 + $0x5c] sm:$0xf]
        %v332 = vld [vmem:[%s276 + $0x60] sm:$0xf]
        %v333 = vld [vmem:[%s276 + $0x64] sm:$0xf]
        %v334 = vld [vmem:[%s276 + $0x68] sm:$0xf]
        %v335 = vld [vmem:[%s276 + $0x6c] sm:$0xf]
        %v336 = vld [vmem:[%s276 + $0x70] sm:$0xf]
        %v337 = vld [vmem:[%s276 + $0x74] sm:$0xf]
        %v338 = vld [vmem:[%s276 + $0x78] sm:$0xf]
        %v339 = vld [vmem:[%s276 + $0x7c] sm:$0xf]
        %v348 = vunpack.c.l.b16 %v300
        %v349 = vunpack.c.h.b16 %v300
        %v350 = vunpack.c.l.b16 %v301
        %v351 = vunpack.c.h.b16 %v301
        %v352 = vunpack.c.l.b16 %v302
        %v353 = vunpack.c.h.b16 %v302
        %v354 = vunpack.c.l.b16 %v303
        %v355 = vunpack.c.h.b16 %v303
        %v356 = vunpack.c.l.b16 %v304
        %v357 = vunpack.c.h.b16 %v304
        %v358 = vunpack.c.l.b16 %v305
        %v359 = vunpack.c.h.b16 %v305
        %v360 = vunpack.c.l.b16 %v306
        %v361 = vunpack.c.h.b16 %v306
        %v362 = vunpack.c.l.b16 %v307
        %v363 = vunpack.c.h.b16 %v307
        %v364 = vpack.c.b16 %v350, %v348
        %v365 = vpack.c.b16 %v351, %v349
        %v366 = vpack.c.b16 %v354, %v352
        %v367 = vpack.c.b16 %v355, %v353
        %v368 = vpack.c.b16 %v358, %v356
        %v369 = vpack.c.b16 %v359, %v357
        %v370 = vpack.c.b16 %v362, %v360
        %v371 = vpack.c.b16 %v363, %v361
        %v412 = vunpack.c.l.b16 %v308
        %v413 = vunpack.c.l.b16 %v309
        %v414 = vunpack.c.l.b16 %v310
        %v415 = vunpack.c.l.b16 %v311
        %v416 = vunpack.c.l.b16 %v312
        %v417 = vunpack.c.l.b16 %v313
        %v418 = vunpack.c.l.b16 %v314
        %v419 = vunpack.c.l.b16 %v315
        %v420 = vunpack.c.l.b16 %v316
        %v421 = vunpack.c.l.b16 %v317
        %v422 = vunpack.c.l.b16 %v318
        %v423 = vunpack.c.l.b16 %v319
        %v424 = vunpack.c.l.b16 %v320
        %v425 = vunpack.c.l.b16 %v321
        %v426 = vunpack.c.l.b16 %v322
        %v427 = vunpack.c.l.b16 %v323
        %v428 = vunpack.c.l.b16 %v324
        %v429 = vunpack.c.l.b16 %v325
        %v430 = vunpack.c.l.b16 %v326
        %v431 = vunpack.c.l.b16 %v327
        %v432 = vunpack.c.l.b16 %v328
        %v433 = vunpack.c.l.b16 %v329
        %v434 = vunpack.c.l.b16 %v330
        %v435 = vunpack.c.l.b16 %v331
        %v436 = vunpack.c.l.b16 %v332
        %v437 = vunpack.c.l.b16 %v333
        %v438 = vunpack.c.l.b16 %v334
        %v439 = vunpack.c.l.b16 %v335
        %v440 = vunpack.c.l.b16 %v336
        %v441 = vunpack.c.l.b16 %v337
        %v442 = vunpack.c.l.b16 %v338
        %v443 = vunpack.c.l.b16 %v339
        %v444 = vpack.c.b16 %v413, %v412
        %v445 = vpack.c.b16 %v415, %v414
        %v446 = vpack.c.b16 %v417, %v416
        %v447 = vpack.c.b16 %v419, %v418
        %v448 = vpack.c.b16 %v421, %v420
        %v449 = vpack.c.b16 %v423, %v422
        %v450 = vpack.c.b16 %v425, %v424
        %v451 = vpack.c.b16 %v427, %v426
        %v452 = vpack.c.b16 %v429, %v428
        %v453 = vpack.c.b16 %v431, %v430
        %v454 = vpack.c.b16 %v433, %v432
        %v455 = vpack.c.b16 %v435, %v434
        %v456 = vpack.c.b16 %v437, %v436
        %v457 = vpack.c.b16 %v439, %v438
        %v458 = vpack.c.b16 %v441, %v440
        %v459 = vpack.c.b16 %v443, %v442
        %476 = vmatprep.subr.bf16.mxu0 0
        %477 = vmatpush1.bf16.msra.mxu0 %v451
        %478 = vmatprep.subr.bf16.mxu0 0
        %479 = vmatpush1.bf16.msra.mxu0 %v450
        %480 = vmatprep.subr.bf16.mxu0 0
        %481 = vmatpush1.bf16.msra.mxu0 %v449
        %482 = vmatprep.subr.bf16.mxu0 0
        %483 = vmatpush1.bf16.msra.mxu0 %v448
        %484 = vmatprep.subr.bf16.mxu0 0
        %485 = vmatpush1.bf16.msra.mxu0 %v447
        %486 = vmatprep.subr.bf16.mxu0 0
        %487 = vmatpush1.bf16.msra.mxu0 %v446
        %488 = vmatprep.subr.bf16.mxu0 0
        %489 = vmatpush1.bf16.msra.mxu0 %v445
        %490 = vmatprep.subr.bf16.mxu0 0
        %491 = vmatpush1.bf16.msra.mxu0 %v444
        %492 = vmatprep.subr.bf16.mxu0 0
        %493 = vmatpush2.bf16.msra.mxu0 %v459
        %494 = vmatprep.subr.bf16.mxu0 0
        %495 = vmatpush2.bf16.msra.mxu0 %v458
        %496 = vmatprep.subr.bf16.mxu0 0
        %497 = vmatpush2.bf16.msra.mxu0 %v457
        %498 = vmatprep.subr.bf16.mxu0 0
        %499 = vmatpush2.bf16.msra.mxu0 %v456
        %500 = vmatprep.subr.bf16.mxu0 0
        %501 = vmatpush2.bf16.msra.mxu0 %v455
        %502 = vmatprep.subr.bf16.mxu0 0
        %503 = vmatpush2.bf16.msra.mxu0 %v454
        %504 = vmatprep.subr.bf16.mxu0 0
        %505 = vmatpush2.bf16.msra.mxu0 %v453
        %506 = vmatprep.subr.bf16.mxu0 0
        %507 = vmatpush2.bf16.msra.mxu0 %v452
        %508 = vmatprep.mubr.bf16.mxu0 %v365
        %509 = vmatmul.mubr.bf16.gmra.mxu0 %v364
        %v510 = vpop.f32.mrf.mxu0
        %v511 = vadd.f32 0.0, %v510
        %v512 = vpop.f32.mrf.mxu0
        %v513 = vpop.f32.mrf.mxu0
        %v514 = vadd.f32 0.0, %v513
        %v515 = vpop.f32.mrf.mxu0
        %516 = vmatprep.mubr.bf16.mxu0 %v367
        %517 = vmatmul.mubr.bf16.gmra.mxu0 %v366
        %v518 = vpop.f32.mrf.mxu0
        %v519 = vadd.f32 0.0, %v518
        %v520 = vpop.f32.mrf.mxu0
        %v521 = vpop.f32.mrf.mxu0
        %v522 = vadd.f32 0.0, %v521
        %v523 = vpop.f32.mrf.mxu0
        %524 = vmatprep.mubr.bf16.mxu0 %v369
        %525 = vmatmul.mubr.bf16.gmra.mxu0 %v368
        %v526 = vpop.f32.mrf.mxu0
        %v527 = vadd.f32 0.0, %v526
        %v528 = vpop.f32.mrf.mxu0
        %v529 = vpop.f32.mrf.mxu0
        %v530 = vadd.f32 0.0, %v529
        %v531 = vpop.f32.mrf.mxu0
        %532 = vmatprep.mubr.bf16.mxu0 %v371
        %533 = vmatmul.mubr.bf16.gmra.mxu0 %v370
        %v534 = vpop.f32.mrf.mxu0
        %v535 = vadd.f32 0.0, %v534
        %v536 = vpop.f32.mrf.mxu0
        %v537 = vpop.f32.mrf.mxu0
        %v538 = vadd.f32 0.0, %v537
        %v539 = vpop.f32.mrf.mxu0
        %540 = vdwg.mxu0
        %v541 = vadd.f32 %v292, %v511
        %v542 = vadd.f32 %v293, %v514
        %v543 = vadd.f32 %v294, %v519
        %v544 = vadd.f32 %v295, %v522
        %v545 = vadd.f32 %v296, %v527
        %v546 = vadd.f32 %v297, %v530
        %v547 = vadd.f32 %v298, %v535
        %v548 = vadd.f32 %v299, %v538
        %549 = vst [vmem:[#allocation2] sm:$0xff] %v541
        %550 = vst [vmem:[#allocation2 + $0x8] sm:$0xff] %v542
        %551 = vst [vmem:[#allocation2 + $0x10] sm:$0xff] %v543
        %552 = vst [vmem:[#allocation2 + $0x18] sm:$0xff] %v544
        %553 = vst [vmem:[#allocation2 + $0x20] sm:$0xff] %v545
        %554 = vst [vmem:[#allocation2 + $0x28] sm:$0xff] %v546
        %555 = vst [vmem:[#allocation2 + $0x30] sm:$0xff] %v547
        %556 = vst [vmem:[#allocation2 + $0x38] sm:$0xff] %v548
        // Predicated region
        $region45: #{patch_merging.1} parent=39 // pred_check
          %p557 = pneg %p280
        $region46: #{patch_merging.1} parent=39 // pred_check_branch
          %559 = sbr.rel (%p557) target = $region48
        $region47: #{patch_merging.1} parent=39 // pred_region
          %v560 = vld [vmem:[#allocation2] sm:$0xff]
          %v561 = vld [vmem:[#allocation2 + $0x8] sm:$0xff]
          %v562 = vld [vmem:[#allocation2 + $0x10] sm:$0xff]
          %v563 = vld [vmem:[#allocation2 + $0x18] sm:$0xff]
          %v564 = vld [vmem:[#allocation2 + $0x20] sm:$0xff]
          %v565 = vld [vmem:[#allocation2 + $0x28] sm:$0xff]
          %v566 = vld [vmem:[#allocation2 + $0x30] sm:$0xff]
          %v567 = vld [vmem:[#allocation2 + $0x38] sm:$0xff]
          %v568 = vld [vmem:[%s2] sm:$0x1]
          %v570 = vlaneseq
          %v571 = vshrl.u32 %v570, 7
          %v572 = vsub.s32 0, %v571
          %v573 = vrot.slane %v568, %v572
          %v575 = vadd.f32 %v560, %v573
          %v576 = vadd.f32 %v561, %v573
          %v577 = vadd.f32 %v562, %v573
          %v578 = vadd.f32 %v563, %v573
          %v579 = vadd.f32 %v564, %v573
          %v580 = vadd.f32 %v565, %v573
          %v581 = vadd.f32 %v566, %v573
          %v582 = vadd.f32 %v567, %v573
          %583 = vadd.xlane.f32.xlu0 %v575
          %v584 = vpop.xlane.xlu0 %583
          %585 = vadd.xlane.f32.xlu0 %v576
          %v586 = vpop.xlane.xlu0 %585
          %587 = vadd.xlane.f32.xlu0 %v577
          %v588 = vpop.xlane.xlu0 %587
          %589 = vadd.xlane.f32.xlu0 %v578
          %v590 = vpop.xlane.xlu0 %589
          %591 = vadd.xlane.f32.xlu0 %v579
          %v592 = vpop.xlane.xlu0 %591
          %593 = vadd.xlane.f32.xlu0 %v580
          %v594 = vpop.xlane.xlu0 %593
          %595 = vadd.xlane.f32.xlu0 %v581
          %v596 = vpop.xlane.xlu0 %595
          %597 = vadd.xlane.f32.xlu0 %v582
          %v598 = vpop.xlane.xlu0 %597
          %v599 = vrcp.pop 128.0
          %v600 = vmul.f32 %v584, %v599
          %v601 = vmul.f32 %v586, %v599
          %v602 = vmul.f32 %v588, %v599
          %v603 = vmul.f32 %v590, %v599
          %v604 = vmul.f32 %v592, %v599
          %v605 = vmul.f32 %v594, %v599
          %v606 = vmul.f32 %v596, %v599
          %v607 = vmul.f32 %v598, %v599
          %v608 = vsub.f32 %v575, %v600
          %v609 = vsub.f32 %v576, %v601
          %v610 = vsub.f32 %v577, %v602
          %v611 = vsub.f32 %v578, %v603
          %v612 = vsub.f32 %v579, %v604
          %v613 = vsub.f32 %v580, %v605
          %v614 = vsub.f32 %v581, %v606
          %v615 = vsub.f32 %v582, %v607
          %v616 = vmul.f32 %v608, %v608
          %v617 = vmul.f32 %v609, %v609
          %v618 = vmul.f32 %v610, %v610
          %v619 = vmul.f32 %v611, %v611
          %v620 = vmul.f32 %v612, %v612
          %v621 = vmul.f32 %v613, %v613
          %v622 = vmul.f32 %v614, %v614
          %v623 = vmul.f32 %v615, %v615
          %624 = vadd.xlane.f32.xlu0 %v616
          %v625 = vpop.xlane.xlu0 %624
          %626 = vadd.xlane.f32.xlu0 %v617
          %v627 = vpop.xlane.xlu0 %626
          %628 = vadd.xlane.f32.xlu0 %v618
          %v629 = vpop.xlane.xlu0 %628
          %630 = vadd.xlane.f32.xlu0 %v619
          %v631 = vpop.xlane.xlu0 %630
          %632 = vadd.xlane.f32.xlu0 %v620
          %v633 = vpop.xlane.xlu0 %632
          %634 = vadd.xlane.f32.xlu0 %v621
          %v635 = vpop.xlane.xlu0 %634
          %636 = vadd.xlane.f32.xlu0 %v622
          %v637 = vpop.xlane.xlu0 %636
          %638 = vadd.xlane.f32.xlu0 %v623
          %v639 = vpop.xlane.xlu0 %638
          %v640 = vmul.f32 %v625, %v599
          %v641 = vmul.f32 %v627, %v599
          %v642 = vmul.f32 %v629, %v599
          %v643 = vmul.f32 %v631, %v599
          %v644 = vmul.f32 %v633, %v599
          %v645 = vmul.f32 %v635, %v599
          %v646 = vmul.f32 %v637, %v599
          %v647 = vmul.f32 %v639, %v599
          %v648 = vadd.f32 %v640, 1e-05
          %v649 = vadd.f32 %v641, 1e-05
          %v650 = vadd.f32 %v642, 1e-05
          %v651 = vadd.f32 %v643, 1e-05
          %v652 = vadd.f32 %v644, 1e-05
          %v653 = vadd.f32 %v645, 1e-05
          %v654 = vadd.f32 %v646, 1e-05
          %v655 = vadd.f32 %v647, 1e-05
          %v656 = vrsqrt.pop %v648
          %v657 = vrsqrt.pop %v649
          %v658 = vrsqrt.pop %v650
          %v659 = vrsqrt.pop %v651
          %v660 = vrsqrt.pop %v652
          %v661 = vrsqrt.pop %v653
          %v662 = vrsqrt.pop %v654
          %v663 = vrsqrt.pop %v655
          %v664 = vmul.f32 %v608, %v656
          %v665 = vmul.f32 %v609, %v657
          %v666 = vmul.f32 %v610, %v658
          %v667 = vmul.f32 %v611, %v659
          %v668 = vmul.f32 %v612, %v660
          %v669 = vmul.f32 %v613, %v661
          %v670 = vmul.f32 %v614, %v662
          %v671 = vmul.f32 %v615, %v663
          %v672 = vld [vmem:[%s3] sm:$0x1]
          %v674 = vlaneseq
          %v675 = vshrl.u32 %v674, 7
          %v676 = vsub.s32 0, %v675
          %v677 = vrot.slane %v672, %v676
          %v679 = vmul.f32 %v664, %v677
          %v680 = vmul.f32 %v665, %v677
          %v681 = vmul.f32 %v666, %v677
          %v682 = vmul.f32 %v667, %v677
          %v683 = vmul.f32 %v668, %v677
          %v684 = vmul.f32 %v669, %v677
          %v685 = vmul.f32 %v670, %v677
          %v686 = vmul.f32 %v671, %v677
          %v687 = vld [vmem:[%s4] sm:$0x1]
          %v689 = vlaneseq
          %v690 = vshrl.u32 %v689, 7
          %v691 = vsub.s32 0, %v690
          %v692 = vrot.slane %v687, %v691
          %v694 = vadd.f32 %v679, %v692
          %v695 = vadd.f32 %v680, %v692
          %v696 = vadd.f32 %v681, %v692
          %v697 = vadd.f32 %v682, %v692
          %v698 = vadd.f32 %v683, %v692
          %v699 = vadd.f32 %v684, %v692
          %v700 = vadd.f32 %v685, %v692
          %v701 = vadd.f32 %v686, %v692
          %702 = vst [vmem:[%s259] sm:$0xff] %v694
          %703 = vst [vmem:[%s259 + $0x8] sm:$0xff] %v695
          %704 = vst [vmem:[%s259 + $0x10] sm:$0xff] %v696
          %705 = vst [vmem:[%s259 + $0x18] sm:$0xff] %v697
          %706 = vst [vmem:[%s259 + $0x20] sm:$0xff] %v698
          %707 = vst [vmem:[%s259 + $0x28] sm:$0xff] %v699
          %708 = vst [vmem:[%s259 + $0x30] sm:$0xff] %v700
          %709 = vst [vmem:[%s259 + $0x38] sm:$0xff] %v701
        $region48: #{patch_merging.1} parent=39 // pred_fallthru
          _
        %s710 = sand.u32 %s156, 1
        %s711 = scalar_lea.sflag [#allocation4], %s710
        %s712 = sand.u32 %s156, 1
        %s713 = smul.addr %s712, 64
        %s714 = scalar_lea.vmem [#allocation3], %s713
        // Predicated region
        $region49: #{patch_merging.1} parent=39 // pred_check
          %p715 = pneg %p166
        $region50: #{patch_merging.1} parent=39 // pred_check_branch
          %717 = sbr.rel (%p715) target = $region52
        $region51: #{patch_merging.1} parent=39 // pred_region
          %s718 = smul.u32 8, %s23
          %s720 = ssub.s32 1024, 1024
          %721 = vsyncadd %s711, %s720
          %s722 = smul.addr %s718, 128
          %s723 = scalar_lea.hbm %s5, %s722
          %s724 = sshll.u32 %s714, 4
          %s725 = int_to_ptr.vmem [resolvable:$true] %s724
          %730 = dma.vmem_to_hbm [thread:$0]  %s725, 1024, %s723, %s711, 128, 128, 8
        $region52: #{patch_merging.1} parent=39 // pred_fallthru
          _
      $region40: #{patch_merging.1} parent=5 // pred_fallthru
        _
      %p731 = scmp.le.s32.totalorder 2, %s14
      // Predicated region
      $region53: #{patch_merging.1} parent=5 // pred_check
        %p732 = pneg %p731
      $region54: #{patch_merging.1} parent=5 // pred_check_branch
        %734 = sbr.rel (%p732) target = $region56
      $region55: #{patch_merging.1} parent=5 // pred_region
        %s735 = ssub.s32 %s14, 2
        // Predicated region
        $region57: #{patch_merging.1} parent=55 // pred_check
          %p736 = pneg %p172
        $region58: #{patch_merging.1} parent=55 // pred_check_branch
          %738 = sbr.rel (%p736) target = $region60
        $region59: #{patch_merging.1} parent=55 // pred_region
          %s739 = sand.u32 %s157, 1
          %s740 = scalar_lea.sflag [#allocation4], %s739
          %s741 = sand.u32 %s157, 1
          %s742 = smul.addr %s741, 64
          %s743 = scalar_lea.vmem [#allocation3], %s742
          %744 = dma.done %s740, 1024
        $region60: #{patch_merging.1} parent=55 // pred_fallthru
          _
      $region56: #{patch_merging.1} parent=5 // pred_fallthru
        _
    $region6: #{patch_merging.1} parent=1 // loop_footer
      %s18 = sadd.s32 1, %s14
    $region7: #{patch_merging.1} parent=1 // loop_footer_branch
      %13 = sbr.rel target = $region3
    $region8: #{patch_merging.1} parent=1 // loop_exit
      _
    %745 = vsyncpa [#allocation4], 1
    %s746 = scalar_lea.sflag [#allocation4], 1
    %747 = vsyncpa %s746, 1

</llo_original>
